<compile_context>
chip_gen: v6e
topology: v6e:2x2x1
jax: 0.10.0
libtpu: 0.0.40
codegen_flags: <defaults>
</compile_context>

<pallas_src>
import functools

import jax
import jax.numpy as jnp
from jax.experimental import pallas as pl
from jax.experimental.pallas import tpu as pltpu

MASK_LOSS = "__mask_loss"

_LANE = 128
_SUBLANE = 8
_TILE_BYTES_CAP = 8 * 1024 * 1024       # max native-dtype bytes per logits tile
_MAX_TILE_ROWS = 4096                   # row cap (review: 1024 was too small)
_SMALL_FALLBACK_ELEMS = 64 * 1024       # below this, use the fused XLA path


def _round_up(x, m):
    return ((x + m - 1) // m) * m


def _pick_vmem_limit_bytes():
    """Scoped VMEM limit per generation (v5e/v6e: 128 MiB phys, v7x: 64 MiB)."""
    try:
        cap = int(pltpu.get_tpu_info().vmem_capacity_bytes)
    except Exception:
        cap = 64 * 1024 * 1024          # conservative (v7x-sized) fallback
    if cap >= 96 * 1024 * 1024:
        return 96 * 1024 * 1024         # v5e / v6e
    return 32 * 1024 * 1024             # v7x


_VMEM_LIMIT_BYTES = _pick_vmem_limit_bytes()


def _ce_mask_kernel(logits_ref, target_ref, out_ref, acc_ref, *, n_valid):
    """One batch tile of summed cross-entropy, accumulated along grid axis 1.

    logits_ref : VMEM (tb, C)      native dtype (f32 / bf16 / f16), C = full class dim
    target_ref : VMEM (cap, 1)     int32, whole (padded) target vector, untiled
    out_ref    : VMEM (8, 128)     f32, per-split partial sum (lane-dense store)
    acc_ref    : VMEM (1, 1)       f32 scratch accumulator (persists over axis 1)
    n_valid    : static true batch size B (rows >= B are masked out)
    """
    c = pl.program_id(0)                 # split index (megacore "parallel" axis)
    i = pl.program_id(1)                 # step within split (reduction axis)
    steps = pl.num_programs(1)
    tb, n_cls = logits_ref.shape

    @pl.when(i == 0)
    def _():
        acc_ref[...] = jnp.zeros_like(acc_ref)

    # Intended (unclamped) block index; may point one past the last real block
    # on the phantom boundary step -- those rows are fully masked below.
    blk = c * steps + i
    row0 = blk * tb

    # ---- target gather on NATIVE-dtype logits (no f32 one-hot / upcast) ----
    start = pl.multiple_of(row0, _SUBLANE)
    tgt = target_ref[pl.ds(start, tb), :]                        # (tb, 1) i32
    x_nat = logits_ref[...]                                      # (tb, C) native
    col = jax.lax.broadcasted_iota(jnp.int32, (1, n_cls), 1)     # (1, C)
    # Only one element per row survives the select, so the native-dtype sum is exact.
    tgt_logit = jnp.sum(jnp.where(col == tgt, x_nat, jnp.zeros_like(x_nat)),
                        axis=-1, keepdims=True).astype(jnp.float32)  # (tb, 1)

    # ---- numerically stable log-sum-exp in f32 ------------------------------
    x = logits_ref[...].astype(jnp.float32)                      # (tb, C)
    row_max = jnp.max(x, axis=-1, keepdims=True)                 # (tb, 1)
    sum_exp = jnp.sum(jnp.exp(x - row_max), axis=-1, keepdims=True)
    lse = jnp.log(sum_exp) + row_max                             # (tb, 1)

    nll = lse - tgt_logit                                        # (tb, 1)

    # Mask rows that lie beyond the true batch (partial / phantom blocks).
    row = jax.lax.broadcasted_iota(jnp.int32, (tb, 1), 0) + row0
    nll = jnp.where(row < n_valid, nll, 0.0)

    acc_ref[...] += jnp.sum(nll, keepdims=True)                  # (1,1)

    @pl.when(i == steps - 1)
    def _():
        # Lane-dense (8,128) broadcast store of the per-split partial sum.
        out_ref[...] = jnp.broadcast_to(acc_ref[...], out_ref.shape)


@functools.partial(jax.jit,
                   static_argnames=("has_base_loss", "block_rows", "force_kernel"))
def mask_loss_wrapper_forward(inputs, target, weight=1.0, has_base_loss=True,
                              block_rows=None, force_kernel=False):
    """JAX/Pallas equivalent of MaskLossWrapper.forward.

    inputs: dict with
      '__mask_loss' : scalar float
      'pred'        : [B, C] float logits (only used when has_base_loss)
    target: [B] int class indices (only used when has_base_loss)
    weight: runtime scalar (traced; no recompile per value)
    block_rows: optional static override of the batch tile height (multiple of 8)
    force_kernel: static; bypass the small-problem XLA fallback
    """
    mask_loss = jnp.asarray(inputs[MASK_LOSS], jnp.float32).reshape(())
    w = jnp.asarray(weight, jnp.float32).reshape(())

    if not has_base_loss:
        # loss is None -> just the weighted mask loss; no kernel launch needed.
        return mask_loss * w

    logits = jnp.asarray(inputs["pred"])
    if logits.dtype not in (jnp.dtype(jnp.float32), jnp.dtype(jnp.bfloat16),
                            jnp.dtype(jnp.float16)):
        logits = logits.astype(jnp.float32)
    tgt = jnp.asarray(target, jnp.int32).reshape(-1, 1)          # (B, 1)
    B, C = logits.shape

    # ---- small-problem fallback: launch overhead dominates -------------------
    if (not force_kernel) and B * C <= _SMALL_FALLBACK_ELEMS:
        logp = jax.nn.log_softmax(logits.astype(jnp.float32), axis=-1)
        nll = -jnp.take_along_axis(logp, tgt, axis=-1)
        return jnp.mean(nll) + mask_loss * w

    # ---- tiling: full class dim per block, no logits padding -----------------
    itemsize = jnp.dtype(logits.dtype).itemsize
    c_lanes = _round_up(C, _LANE)                 # physical lane footprint
    if block_rows is not None:
        assert block_rows % _SUBLANE == 0 and block_rows > 0
        tb = block_rows
    else:
        # VMEM model: 2 pipeline buffers (native) + f32 upcast + exp temp + select
        # temp must fit in ~3/4 of the scoped limit.
        f32_factor = max(1, 4 // itemsize)
        per_tile_mult = 2 + 2 * f32_factor + 1
        budget = min(_TILE_BYTES_CAP, (3 * _VMEM_LIMIT_BYTES // 4) // per_tile_mult)
        tb = (budget // (c_lanes * itemsize)) // _SUBLANE * _SUBLANE
        tb = max(_SUBLANE, min(tb, _MAX_TILE_ROWS))
    tb = min(tb, _round_up(B, _SUBLANE))

    nblocks = pl.cdiv(B, tb)
    # Leading "parallel" axis -> both TensorCores on v7x; serial (harmless) on
    # single-TC chips.  When nblocks is odd one split runs a phantom boundary
    # step whose block index is clamped and whose rows are fully masked.
    splits = 2 if nblocks >= 2 else 1
    steps = pl.cdiv(nblocks, splits)

    if splits * steps == nblocks:
        logits_index = lambda cc, ii: (cc * steps + ii, 0)
    else:
        logits_index = lambda cc, ii: (jnp.minimum(cc * steps + ii, nblocks - 1), 0)

    # Only the tiny target vector is padded (to grid capacity) so in-kernel
    # slices stay in bounds even on the phantom step.
    cap = splits * steps * tb
    tgt_p = jnp.pad(tgt, ((0, cap - B), (0, 0)))

    partials = pl.pallas_call(
        functools.partial(_ce_mask_kernel, n_valid=B),
        out_shape=jax.ShapeDtypeStruct((splits, _SUBLANE, _LANE), jnp.float32),
        grid=(splits, steps),
        in_specs=[
            pl.BlockSpec((tb, C), logits_index),          # streamed logits tiles
            pl.BlockSpec(memory_space=pltpu.VMEM),        # whole target, untiled
        ],
        out_specs=pl.BlockSpec((None, _SUBLANE, _LANE), lambda cc, ii: (cc, 0, 0)),
        scratch_shapes=[pltpu.VMEM((1, 1), jnp.float32)],
        compiler_params=pltpu.CompilerParams(
            dimension_semantics=("parallel", "arbitrary"),
            vmem_limit_bytes=_VMEM_LIMIT_BYTES,
        ),
    )(logits, tgt_p)

    # Mean over the true batch + weighted mask loss (scalar work; done in XLA).
    ce = jnp.sum(partials[:, 0, 0]) / B
    return ce + mask_loss * w


def _reference(inputs, target, weight, has_base_loss):
    mask_loss = jnp.asarray(inputs[MASK_LOSS], jnp.float32) * jnp.float32(weight)
    if not has_base_loss:
        return mask_loss
    logits = jnp.asarray(inputs["pred"]).astype(jnp.float32)
    logp = jax.nn.log_softmax(logits, axis=-1)
    nll = -jnp.take_along_axis(logp, jnp.asarray(target, jnp.int32)[:, None],
                               axis=-1)
    return jnp.mean(nll) + mask_loss


if __name__ == "__main__":
    key = jax.random.PRNGKey(0)
    k1, k2, k3, k4, k5, k6, k7 = jax.random.split(key, 7)

    mask_loss = jnp.abs(jax.random.normal(k3, (), dtype=jnp.float32))

    # ---- Case 1: tiny f32 logits, single block, splits=1 --------------------
    B1, C1 = 8, 32
    logits1 = jax.random.normal(k1, (B1, C1), dtype=jnp.float32)
    target1 = jax.random.randint(k2, (B1,), 0, C1, dtype=jnp.int32)
    in1 = {"pred": logits1, MASK_LOSS: mask_loss}
    out1 = jax.block_until_ready(
        mask_loss_wrapper_forward(in1, target1, weight=0.5, force_kernel=True))
    ref1 = _reference(in1, target1, 0.5, True)
    assert jnp.allclose(out1, ref1, rtol=1e-5, atol=1e-5), (out1, ref1)

    # ---- Case 2: ragged bf16 (B%8!=0, C%128!=0), small tiles ->
    #              multi-step grid, 2-way split, phantom + partial blocks -----
    B2, C2 = 50, 200
    logits2 = jax.random.normal(k4, (B2, C2), jnp.float32).astype(jnp.bfloat16)
    target2 = jax.random.randint(k5, (B2,), 0, C2, dtype=jnp.int32)
    in2 = {"pred": logits2, MASK_LOSS: mask_loss}
    out2 = jax.block_until_ready(
        mask_loss_wrapper_forward(in2, target2, weight=2.0, force_kernel=True,
                                  block_rows=8))
    ref2 = _reference(in2, target2, 2.0, True)
    assert jnp.allclose(out2, ref2, rtol=2e-3, atol=2e-3), (out2, ref2)

    # ---- Case 3: moderate f32, automatic tile-size selection ----------------
    B3, C3 = 304, 160
    logits3 = jax.random.normal(k6, (B3, C3), dtype=jnp.float32)
    target3 = jax.random.randint(k7, (B3,), 0, C3, dtype=jnp.int32)
    in3 = {"pred": logits3, MASK_LOSS: mask_loss}
    out3 = jax.block_until_ready(
        mask_loss_wrapper_forward(in3, target3, weight=1.0, force_kernel=True))
    ref3 = _reference(in3, target3, 1.0, True)
    assert jnp.allclose(out3, ref3, rtol=1e-4, atol=1e-4), (out3, ref3)

    # ---- Case 4: small-problem fallback path (fused XLA, no kernel) ---------
    out4 = jax.block_until_ready(
        mask_loss_wrapper_forward(in1, target1, weight=0.5))
    ref4 = _reference(in1, target1, 0.5, True)
    assert jnp.allclose(out4, ref4, rtol=1e-5, atol=1e-5), (out4, ref4)

    # ---- Case 5: loss is None -> weighted mask loss only --------------------
    out5 = jax.block_until_ready(
        mask_loss_wrapper_forward(in1, target1, weight=0.5, has_base_loss=False))
    ref5 = _reference(in1, target1, 0.5, False)
    assert jnp.allclose(out5, ref5, rtol=1e-6, atol=1e-6), (out5, ref5)

    print("KERNEL_OK")
</pallas_src>

<mosaic_0001>
module attributes {stable_mosaic.version = 11 : i64} {
  func.func @_ce_mask_kernel(%arg0: i32, %arg1: i32, %arg2: memref<8x32xf32, #tpu.memory_space<vmem>>, %arg3: memref<8x1xi32, #tpu.memory_space<vmem>>, %arg4: memref<1x8x128xf32, #tpu.memory_space<vmem>>, %arg5: memref<1x1xf32, #tpu.memory_space<vmem>>) attributes {dimension_semantics = [#tpu.dimension_semantics<parallel>, #tpu.dimension_semantics<arbitrary>], iteration_bounds = array<i64: 1, 1>, scalar_prefetch = 0 : i64, scratch_operands = 1 : i64, tpu.core_type = #tpu.core_type<tc>, window_params = [{transform_indices = @transform_0, window_bounds = array<i64: 8, 32>}, {pipeline_mode = #tpu.pipeline_mode<synchronous>, transform_indices = @transform_1, window_bounds = array<i64: 8, 1>}, {transform_indices = @transform_2, window_bounds = array<i64: 1, 8, 128>}]} {
    %c0_i32 = arith.constant 0 : i32
    %0 = arith.cmpi eq, %arg1, %c0_i32 : i32
    %1 = arith.extui %0 : i1 to i32
    %c0_i32_0 = arith.constant 0 : i32
    %2 = arith.cmpi ne, %1, %c0_i32_0 : i32
    scf.if %2 {
      %cst_17 = arith.constant 0.000000e+00 : f32
      %47 = vector.broadcast %cst_17 : f32 to vector<1x1xf32>
      %c0_18 = arith.constant 0 : index
      %c0_19 = arith.constant 0 : index
      %48 = vector.load %arg5[%c0_18, %c0_19] : memref<1x1xf32, #tpu.memory_space<vmem>>, vector<1x1xf32>
      tpu.vector_store %arg5[%c0_18, %c0_19], %47 {strides = array<i32>} : memref<1x1xf32, #tpu.memory_space<vmem>>, vector<1x1xf32>,
    } else {
    }
    %c1_i32 = arith.constant 1 : i32
    %3 = arith.muli %arg0, %c1_i32 : i32
    %4 = arith.addi %3, %arg1 : i32
    %c8_i32 = arith.constant 8 : i32
    %5 = arith.muli %4, %c8_i32 : i32
    %6 = tpu.assume_multiple %5, 8 : i32
    %7 = arith.index_cast %6 : i32 to index
    %c0 = arith.constant 0 : index
    %8 = vector.load %arg3[%7, %c0] : memref<8x1xi32, #tpu.memory_space<vmem>>, vector<8x1xi32>
    %c0_1 = arith.constant 0 : index
    %c0_2 = arith.constant 0 : index
    %9 = vector.load %arg2[%c0_1, %c0_2] : memref<8x32xf32, #tpu.memory_space<vmem>>, vector<8x32xf32>
    %10 = tpu.iota {dimensions = array<i32: 1>} : vector<1x32xi32>
    %11 = vector.broadcast %10 : vector<1x32xi32> to vector<8x32xi32>
    %12 = vector.broadcast %8 : vector<8x1xi32> to vector<8x32xi32>
    %13 = arith.cmpi eq, %11, %12 : vector<8x32xi32>
    %cst = arith.constant 0.000000e+00 : f32
    %14 = vector.broadcast %cst : f32 to vector<8x32xf32>
    %15 = arith.select %13, %9, %14 : vector<8x32xi1>, vector<8x32xf32>
    %cst_3 = arith.constant dense<0.000000e+00> : vector<8xf32>
    %16 = vector.multi_reduction <add>, %15, %cst_3 [1] : vector<8x32xf32> to vector<8xf32>
    %17 = vector.shape_cast %16 : vector<8xf32> to vector<8x1xf32>
    %c0_4 = arith.constant 0 : index
    %c0_5 = arith.constant 0 : index
    %18 = vector.load %arg2[%c0_4, %c0_5] : memref<8x32xf32, #tpu.memory_space<vmem>>, vector<8x32xf32>
    %cst_6 = arith.constant dense<0xFF800000> : vector<8xf32>
    %19 = vector.multi_reduction <maximumf>, %18, %cst_6 [1] : vector<8x32xf32> to vector<8xf32>
    %20 = vector.shape_cast %19 : vector<8xf32> to vector<8x1xf32>
    %21 = vector.broadcast %20 : vector<8x1xf32> to vector<8x32xf32>
    %22 = arith.subf %18, %21 : vector<8x32xf32>
    %23 = math.exp %22 : vector<8x32xf32>
    %cst_7 = arith.constant dense<0.000000e+00> : vector<8xf32>
    %24 = vector.multi_reduction <add>, %23, %cst_7 [1] : vector<8x32xf32> to vector<8xf32>
    %25 = vector.shape_cast %24 : vector<8xf32> to vector<8x1xf32>
    %26 = math.log %25 : vector<8x1xf32>
    %27 = arith.addf %26, %20 : vector<8x1xf32>
    %28 = arith.subf %27, %17 : vector<8x1xf32>
    %29 = tpu.iota {dimensions = array<i32: 0>} : vector<8x1xi32>
    %30 = vector.broadcast %5 : i32 to vector<8x1xi32>
    %31 = arith.addi %29, %30 : vector<8x1xi32>
    %c8_i32_8 = arith.constant 8 : i32
    %32 = vector.broadcast %c8_i32_8 : i32 to vector<8x1xi32>
    %33 = arith.cmpi slt, %31, %32 : vector<8x1xi32>
    %cst_9 = arith.constant 0.000000e+00 : f32
    %34 = vector.broadcast %cst_9 : f32 to vector<8x1xf32>
    %35 = arith.select %33, %28, %34 : vector<8x1xi1>, vector<8x1xf32>
    %c0_10 = arith.constant 0 : index
    %c0_11 = arith.constant 0 : index
    %36 = vector.load %arg5[%c0_10, %c0_11] : memref<1x1xf32, #tpu.memory_space<vmem>>, vector<1x1xf32>
    %37 = vector.shape_cast %35 : vector<8x1xf32> to vector<1x8x1xf32>
    %cst_12 = arith.constant dense<0.000000e+00> : vector<1xf32>
    %38 = vector.multi_reduction <add>, %37, %cst_12 [1, 2] : vector<1x8x1xf32> to vector<1xf32>
    %39 = vector.shape_cast %38 : vector<1xf32> to vector<1x1x1xf32>
    %40 = vector.extract %39[0, 0, 0] : f32 from vector<1x1x1xf32>
    %41 = vector.broadcast %40 : f32 to vector<1x1xf32>
    %42 = arith.addf %36, %41 : vector<1x1xf32>
    %c0_13 = arith.constant 0 : index
    %c0_14 = arith.constant 0 : index
    %43 = vector.load %arg5[%c0_13, %c0_14] : memref<1x1xf32, #tpu.memory_space<vmem>>, vector<1x1xf32>
    tpu.vector_store %arg5[%c0_13, %c0_14], %42 {strides = array<i32>} : memref<1x1xf32, #tpu.memory_space<vmem>>, vector<1x1xf32>,
    %c0_i32_15 = arith.constant 0 : i32
    %44 = arith.cmpi eq, %arg1, %c0_i32_15 : i32
    %45 = arith.extui %44 : i1 to i32
    %c0_i32_16 = arith.constant 0 : i32
    %46 = arith.cmpi ne, %45, %c0_i32_16 : i32
    scf.if %46 {
      %c0_17 = arith.constant 0 : index
      %c0_18 = arith.constant 0 : index
      %47 = vector.load %arg5[%c0_17, %c0_18] : memref<1x1xf32, #tpu.memory_space<vmem>>, vector<1x1xf32>
      %48 = vector.shape_cast %47 : vector<1x1xf32> to vector<1x1xf32>
      %49 = vector.broadcast %48 : vector<1x1xf32> to vector<8x128xf32>
      %c0_19 = arith.constant 0 : index
      %c0_20 = arith.constant 0 : index
      %c0_21 = arith.constant 0 : index
      %50 = vector.load %arg4[%c0_19, %c0_20, %c0_21] : memref<1x8x128xf32, #tpu.memory_space<vmem>>, vector<1x8x128xf32>
      %51 = vector.shape_cast %50 : vector<1x8x128xf32> to vector<8x128xf32>
      %52 = vector.shape_cast %49 : vector<8x128xf32> to vector<1x8x128xf32>
      tpu.vector_store %arg4[%c0_19, %c0_20, %c0_21], %52 {strides = array<i32>} : memref<1x8x128xf32, #tpu.memory_space<vmem>>, vector<1x8x128xf32>,
    } else {
    }
    return
  }
  func.func @transform_0(%arg0: i32, %arg1: i32) -> (i32, i32) {
    %c1_i32 = arith.constant 1 : i32
    %0 = arith.muli %arg0, %c1_i32 : i32
    %1 = arith.addi %0, %arg1 : i32
    %c0_i32 = arith.constant 0 : i32
    %c0_i32_0 = arith.constant 0 : i32
    return %1, %c0_i32 : i32, i32
  }
  func.func @transform_1(%arg0: i32, %arg1: i32) -> (i32, i32) {
    %c0_i32 = arith.constant 0 : i32
    %c0_i32_0 = arith.constant 0 : i32
    %c0_i32_1 = arith.constant 0 : i32
    return %c0_i32, %c0_i32_0 : i32, i32
  }
  func.func @transform_2(%arg0: i32, %arg1: i32) -> (i32, i32, i32) {
    %c0_i32 = arith.constant 0 : i32
    %c0_i32_0 = arith.constant 0 : i32
    %c0_i32_1 = arith.constant 0 : i32
    return %arg0, %c0_i32, %c0_i32_0 : i32, i32, i32
  }
}

</mosaic_0001>

<llo_original>
// kernel: mask_loss_wrapper_forward.1
$region0: #{mask_loss_wrapper_forward.1}
  #allocation0 [shape = 'u32[]', space=smem, size = 0x4, offset = 0x4, fixed_abs, tag = 'smem constant byte address 0x4 - core index']
  #allocation1 [shape = 'u32[144,128]{1,0:T(1,128)}', space=vmem, size = 0x12000, scoped, tag = 'internal scratch']
  #allocation2 [shape = 'f32[1,1]{1,0:T(1,128)}', space=vmem, size = 0x200, scoped, tag = 'scratch operand']
  %s0 = inlined_call_operand.vmem [shape: f32[8,32], index: 0, kind: input, shape index: {}]
  %s1 = inlined_call_operand.vmem [shape: s32[8,1], index: 1, kind: input, shape index: {}]
  %s2 = inlined_call_operand.vmem [shape: f32[1,8,128], index: 2, kind: output, shape index: {}]
  %s3 = sld [smem:[#allocation0]]
  $region26: #{mask_loss_wrapper_forward.1} parent=0
    _
  %s5 = ssub.s32 1, %s3
  %s6 = scalar_select 0, %s5, %s3
  // Predicated region
  $region2: #{mask_loss_wrapper_forward.1} parent=0 // pred_check
    _
  $region3: #{mask_loss_wrapper_forward.1} parent=0 // pred_check_branch
    %8 = sbr.rel (0) target = $region5
  $region4: #{mask_loss_wrapper_forward.1} parent=0 // pred_region
    %s9 = sadd.s32 0, 0
    %p10 = scmp.lt.s32.totalorder %s9, 0
    %s11 = scalar_select %p10, %s9, 0
    %s12 = smul.addr %s11, 8
    %s13 = scalar_lea.vmem %s0, %s12
    %s14 = sadd.s32 0, 0
  $region5: #{mask_loss_wrapper_forward.1} parent=0 // pred_fallthru
    _
  // Predicated region
  $region6: #{mask_loss_wrapper_forward.1} parent=0 // pred_check
    _
  $region7: #{mask_loss_wrapper_forward.1} parent=0 // pred_check_branch
    %16 = sbr.rel (0) target = $region9
  $region8: #{mask_loss_wrapper_forward.1} parent=0 // pred_region
    _
  $region9: #{mask_loss_wrapper_forward.1} parent=0 // pred_fallthru
    _
  %s17 = sadd.s32 0, 0
  %p18 = scmp.lt.s32.totalorder %s17, 0
  %s19 = scalar_select %p18, %s17, 0
  %s20 = smul.addr %s19, 8
  %s21 = scalar_lea.vmem %s0, %s20
  %s22 = sadd.s32 0, 0
  %p23 = scmp.lt.s32.totalorder %s22, 0
  %s24 = scalar_select %p23, %s22, 0
  %s25 = smul.addr %s24, 8
  %s26 = scalar_lea.vmem %s0, %s25
  %s27 = sadd.s32 0, 0
  %p28 = scmp.eq.s32.totalorder 0, 0
  // Predicated region
  $region10: #{mask_loss_wrapper_forward.1} parent=0 // pred_check
    %p29 = pneg %p28
  $region11: #{mask_loss_wrapper_forward.1} parent=0 // pred_check_branch
    %31 = sbr.rel (%p29) target = $region13
  $region12: #{mask_loss_wrapper_forward.1} parent=0 // pred_region
    %vm32 = vcmask 0
    %33 = vst.msk [vmem:[#allocation2] sm:$0x1] %vm32, 0.0
  $region13: #{mask_loss_wrapper_forward.1} parent=0 // pred_fallthru
    _
  %s34 = sadd.s32 0, 0
  %s35 = smul.u32 %s34, 8
  %s36 = scalar_lea.vmem %s1, %s35
  %v37 = vld [vmem:[%s36] sm:$0xff]
  %v38 = vld [vmem:[%s26] sm:$0xff]
  %v39 = vlaneseq
  %v40 = vand.u32 %v39, 127
  %41 = vset.pattern.permute.xlu0 0
  %42 = vperm.xlu0 %41, %v37
  %v43 = vpop.permute.xlu0 %42
  %vm44 = vcmp.eq.s32.totalorder %v40, %v43
  %v45 = vsel %vm44, %v38, 0.0
  %vm46 = vcmask 261120
  %v47 = vsel %vm46, %v45, 0.0
  %48 = vadd.xlane.f32.xlu0 %v47
  %v49 = vpop.xlane.xlu0 %48
  %v50 = vsel %vm46, %v38, -inf
  %51 = vmax.xlane.f32.xlu0 %v50
  %v52 = vpop.xlane.xlu0 %51
  %v53 = vsub.f32 %v38, %v52
  %v54 = vmul.f32 %v53, 1.442695
  %v55 = vpow.pop %v54
  %v56 = vsel %vm46, %v55, 0.0
  %57 = vadd.xlane.f32.xlu0 %v56
  %v58 = vpop.xlane.xlu0 %57
  %v59 = vlog2.pop %v58
  %v60 = vmul.f32 %v59, 0.6931472
  %v61 = vadd.f32 %v60, %v52
  %v62 = vsub.f32 %v61, %v49
  %v63 = vlaneseq
  %v64 = vshrl.u32 %v63, 7
  %v65 = vstv %s35
  %v66 = vadd.s32 %v64, %v65
  %vm67 = vcmp.lt.s32.totalorder %v66, 8
  %v68 = vsel %vm67, %v62, 0.0
  %v69 = vld [vmem:[#allocation2] sm:$0x1]
  %vm70 = vcmask 7168
  %v71 = vsel %vm70, %v68, 0.0
  %72 = vadd.xlane.f32.xlu0 %v71
  %v73 = vpop.xlane.xlu0 %72
  %v74 = vrot.slane %v73, 4
  %v75 = vadd.f32 %v73, %v74
  %v76 = vrot.slane %v75, 2
  %v77 = vadd.f32 %v75, %v76
  %v78 = vrot.slane %v77, 1
  %v79 = vadd.f32 %v77, %v78
  %s80 = vtos %v79
  %v81 = vstv %s80
  %v82 = vadd.f32 %v69, %v81
  %vm83 = vcmask 0
  %84 = vst.msk [vmem:[#allocation2] sm:$0x1] %vm83, %v82
  // Predicated region
  $region14: #{mask_loss_wrapper_forward.1} parent=0 // pred_check
    %p85 = pneg %p28
  $region15: #{mask_loss_wrapper_forward.1} parent=0 // pred_check_branch
    %87 = sbr.rel (%p85) target = $region17
  $region16: #{mask_loss_wrapper_forward.1} parent=0 // pred_region
    %v88 = vld [vmem:[#allocation2] sm:$0x1]
    %v90 = vlaneseq
    %v91 = vshrl.u32 %v90, 7
    %v92 = vsub.s32 0, %v91
    %v93 = vrot.slane %v88, %v92
    %94 = vset.pattern.permute.xlu0 0
    %95 = vperm.xlu0 %94, %v93
    %v96 = vpop.permute.xlu0 %95
    %98 = vst [vmem:[%s2] sm:$0xff] %v96
  $region17: #{mask_loss_wrapper_forward.1} parent=0 // pred_fallthru
    _
  // Predicated region
  $region18: #{mask_loss_wrapper_forward.1} parent=0 // pred_check
    _
  $region19: #{mask_loss_wrapper_forward.1} parent=0 // pred_check_branch
    %100 = sbr.rel (0) target = $region21
  $region20: #{mask_loss_wrapper_forward.1} parent=0 // pred_region
    _
  $region21: #{mask_loss_wrapper_forward.1} parent=0 // pred_fallthru
    _
  // Predicated region
  $region22: #{mask_loss_wrapper_forward.1} parent=0 // pred_check
    _
  $region23: #{mask_loss_wrapper_forward.1} parent=0 // pred_check_branch
    %102 = sbr.rel (0) target = $region25
  $region24: #{mask_loss_wrapper_forward.1} parent=0 // pred_region
    _
  $region25: #{mask_loss_wrapper_forward.1} parent=0 // pred_fallthru
    _

</llo_original>
